<compile_context>
chip_gen: v7x
topology: tpu7x:2x2x1
jax: 0.10.0
libtpu: 0.0.40
codegen_flags: <defaults>
</compile_context>

<pallas_src>
import math

import jax
import jax.numpy as jnp
from jax.experimental import pallas as pl
from jax.experimental.pallas import tpu as pltpu


# -----------------------------------------------------------------------------
# Sinusoidal positional-encoding table, shape (max_len, 1, d_model).
# Build it once (ideally in the compute dtype) and reuse across calls.
# -----------------------------------------------------------------------------
def _build_pe_table(d_model: int, max_len: int, dtype=jnp.float32) -> jnp.ndarray:
    position = jnp.arange(0, max_len, dtype=jnp.float32)[:, None]            # (max_len, 1)
    div_term = jnp.exp(
        jnp.arange(0, d_model, 2, dtype=jnp.float32) * (-math.log(10000.0) / d_model)
    )                                                                          # (d_model/2,)
    angles = position * div_term                                               # (max_len, d_model/2)
    pe = jnp.zeros((max_len, d_model), dtype=jnp.float32)
    pe = pe.at[:, 0::2].set(jnp.sin(angles))
    pe = pe.at[:, 1::2].set(jnp.cos(angles))
    # pe.unsqueeze(0).transpose(0, 1) -> (max_len, 1, d_model)
    return pe[:, None, :].astype(dtype)


# -----------------------------------------------------------------------------
# Kernel body: plain elementwise add. Works for both the 3-D blocks
# (TS, B, D) + (TS, 1, D)  (sublane-broadcast over batch) and the 2-D blocks
# (TS, D) + (TS, D).
# -----------------------------------------------------------------------------
def _pos_enc_kernel(x_ref, pe_ref, o_ref):
    o_ref[...] = x_ref[...] + pe_ref[...]


# -----------------------------------------------------------------------------
# Generation-aware scoped-VMEM limit:
#   v7x  : 64 MiB physical  -> 48 MiB scoped limit
#   v5e/v6e: 128 MiB physical -> 64 MiB scoped limit
# Fallback (query unavailable) assumes the smallest physical VMEM (v7x).
# -----------------------------------------------------------------------------
def _scoped_vmem_limit_bytes() -> int:
    phys = None
    try:
        phys = getattr(pltpu.get_tpu_info(), "vmem_capacity_bytes", None)
    except Exception:
        phys = None
    if not phys:
        phys = 64 << 20
    return int(min(64 << 20, (phys * 3) // 4))


def _align_up(v: int, m: int) -> int:
    return ((v + m - 1) // m) * m


def _pick_seq_tile(S: int, x_step_bytes: int, pe_step_bytes: int,
                   vmem_limit: int, total_x_bytes: int, sub_mult: int) -> int:
    """Seq-tile so the double-buffered live set (2x in + 2x out + 2x pe) fits
    in ~80% of the scoped-VMEM limit; tile count made even for v7x megacore."""
    budget = (vmem_limit * 4) // 5
    per_step = max(1, 4 * x_step_bytes + 2 * pe_step_bytes)
    ts = max(1, budget // per_step)
    ts = min(ts, S)
    n_tiles = -(-S // ts)
    # Megacore balance: only worth splitting if the whole problem is non-trivial.
    if total_x_bytes >= (8 << 20):
        if n_tiles < 2:
            n_tiles = 2
        elif n_tiles % 2 == 1:
            n_tiles += 1
        ts = -(-S // n_tiles)
    if ts < S:
        ts = min(S, _align_up(ts, sub_mult))   # sublane/DMA-friendly alignment
    return max(1, ts)


# -----------------------------------------------------------------------------
# Public wrapper: out = x + pe[:S]  (eval-mode dropout == identity)
# -----------------------------------------------------------------------------
def positional_encoding(x: jnp.ndarray, pe: jnp.ndarray, *,
                        seq_tile: int | None = None,
                        donate_x: bool = False) -> jnp.ndarray:
    """x: (S, B, D); pe: (max_len, 1, D). Returns x + pe[:S]."""
    S, B, D = x.shape
    max_len = pe.shape[0]
    if S > max_len:
        raise ValueError(f"sequence length {S} exceeds positional-encoding max_len {max_len}")

    itemsize = jnp.dtype(x.dtype).itemsize
    sub_mult = {4: 8, 2: 16, 1: 32}.get(itemsize, 8)
    vmem_limit = _scoped_vmem_limit_bytes()

    # Static slice; cast only when the caller did not pre-build pe in x.dtype.
    pe_slice = pe[:S]
    if pe_slice.dtype != x.dtype:
        pe_slice = pe_slice.astype(x.dtype)

    io_alias = {0: 0} if donate_x else {}
    cparams = pltpu.CompilerParams(
        dimension_semantics=("parallel",),   # seq tiles independent -> v7x megacore
        vmem_limit_bytes=vmem_limit,
    )

    # ---------------- 2-D fast path: B == 1 (decode-style) -------------------
    # Puts the sequence axis on sublanes -> dense vregs / unmasked vst instead
    # of a size-1 sublane dimension.
    if B == 1:
        x2 = x.reshape(S, D)                 # bitcast-free reshape
        pe2 = pe_slice.reshape(S, D)
        if seq_tile is None:
            seq_tile = _pick_seq_tile(S, D * itemsize, D * itemsize,
                                      vmem_limit, S * D * itemsize, sub_mult)
        else:
            seq_tile = max(1, min(seq_tile, S))
            if seq_tile < S:
                seq_tile = min(S, _align_up(seq_tile, sub_mult))
        grid = (pl.cdiv(S, seq_tile),)
        out2 = pl.pallas_call(
            _pos_enc_kernel,
            out_shape=jax.ShapeDtypeStruct((S, D), x.dtype),
            grid=grid,
            in_specs=[
                pl.BlockSpec((seq_tile, D), lambda i: (i, 0)),
                pl.BlockSpec((seq_tile, D), lambda i: (i, 0)),
            ],
            out_specs=pl.BlockSpec((seq_tile, D), lambda i: (i, 0)),
            compiler_params=cparams,
            input_output_aliases=io_alias,
        )(x2, pe2)
        return out2.reshape(S, B, D)

    # ---------------- 3-D path: general (S, B, D) ----------------------------
    if seq_tile is None:
        seq_tile = _pick_seq_tile(S, B * D * itemsize, D * itemsize,
                                  vmem_limit, S * B * D * itemsize, sub_mult)
    else:
        seq_tile = max(1, min(seq_tile, S))
    grid = (pl.cdiv(S, seq_tile),)

    return pl.pallas_call(
        _pos_enc_kernel,
        out_shape=jax.ShapeDtypeStruct((S, B, D), x.dtype),
        grid=grid,
        in_specs=[
            pl.BlockSpec((seq_tile, B, D), lambda i: (i, 0, 0)),
            pl.BlockSpec((seq_tile, 1, D), lambda i: (i, 0, 0)),   # broadcast over B in-kernel
        ],
        out_specs=pl.BlockSpec((seq_tile, B, D), lambda i: (i, 0, 0)),
        compiler_params=cparams,
        input_output_aliases=io_alias,
    )(x, pe_slice)


if __name__ == "__main__":
    d_model = 32
    max_len = 100
    batch = 2

    pe = _build_pe_table(d_model, max_len)           # fp32 table (PyTorch default)
    key = jax.random.PRNGKey(0)

    # 1) Base demo shape (S=8, B=2, D=32): single tile, 3-D path.
    seq = 8
    x = jax.random.normal(key, (seq, batch, d_model), dtype=jnp.float32)
    out = jax.block_until_ready(positional_encoding(x, pe))
    ref = x + pe[:seq]
    assert out.shape == (seq, batch, d_model)
    assert jnp.allclose(out, ref, atol=1e-6), "mismatch (single-tile 3-D path)"

    # 2) Multi-tile pipelined path (grid=(4,)).
    seq2 = 32
    x2 = jax.random.normal(jax.random.PRNGKey(1), (seq2, batch, d_model), dtype=jnp.float32)
    out2 = jax.block_until_ready(positional_encoding(x2, pe, seq_tile=8))
    assert jnp.allclose(out2, x2 + pe[:seq2], atol=1e-6), "mismatch (tiled 3-D path)"

    # 3) Partial last tile: S % seq_tile != 0 (grid=(3,), last block masked).
    seq3 = 20
    x3 = jax.random.normal(jax.random.PRNGKey(2), (seq3, batch, d_model), dtype=jnp.float32)
    out3 = jax.block_until_ready(positional_encoding(x3, pe, seq_tile=8))
    assert jnp.allclose(out3, x3 + pe[:seq3], atol=1e-6), "mismatch (partial last tile)"

    # 4) B=1 decode-style call -> 2-D fast path.
    seq4 = 16
    x4 = jax.random.normal(jax.random.PRNGKey(3), (seq4, 1, d_model), dtype=jnp.float32)
    out4 = jax.block_until_ready(positional_encoding(x4, pe))
    assert jnp.allclose(out4, x4 + pe[:seq4], atol=1e-6), "mismatch (B=1 2-D path)"

    # 5) bf16 dtype-matched path (add done in bf16; see numerics note above).
    x5 = jax.random.normal(jax.random.PRNGKey(4), (seq2, batch, d_model),
                           dtype=jnp.float32).astype(jnp.bfloat16)
    out5 = jax.block_until_ready(positional_encoding(x5, pe, seq_tile=16))
    ref5 = (x5.astype(jnp.float32) + pe[:seq2]).astype(jnp.bfloat16)
    assert jnp.allclose(out5.astype(jnp.float32), ref5.astype(jnp.float32),
                        atol=3e-2), "mismatch (bf16 path)"

    print("KERNEL_OK")
</pallas_src>

<mosaic_0001>
module attributes {stable_mosaic.version = 11 : i64} {
  func.func @_pos_enc_kernel(%arg0: i32, %arg1: memref<8x2x32xf32, #tpu.memory_space<vmem>>, %arg2: memref<8x1x32xf32, #tpu.memory_space<vmem>>, %arg3: memref<8x2x32xf32, #tpu.memory_space<vmem>>) attributes {dimension_semantics = [#tpu.dimension_semantics<parallel>], iteration_bounds = array<i64: 1>, scalar_prefetch = 0 : i64, scratch_operands = 0 : i64, tpu.core_type = #tpu.core_type<tc>, window_params = [{transform_indices = @transform_0, window_bounds = array<i64: 8, 2, 32>}, {transform_indices = @transform_1, window_bounds = array<i64: 8, 1, 32>}, {transform_indices = @transform_2, window_bounds = array<i64: 8, 2, 32>}]} {
    %c0 = arith.constant 0 : index
    %c0_0 = arith.constant 0 : index
    %c0_1 = arith.constant 0 : index
    %0 = vector.load %arg1[%c0, %c0_0, %c0_1] : memref<8x2x32xf32, #tpu.memory_space<vmem>>, vector<8x2x32xf32>
    %c0_2 = arith.constant 0 : index
    %c0_3 = arith.constant 0 : index
    %c0_4 = arith.constant 0 : index
    %1 = vector.load %arg2[%c0_2, %c0_3, %c0_4] : memref<8x1x32xf32, #tpu.memory_space<vmem>>, vector<8x1x32xf32>
    %2 = vector.broadcast %1 : vector<8x1x32xf32> to vector<8x2x32xf32>
    %3 = arith.addf %0, %2 : vector<8x2x32xf32>
    %c0_5 = arith.constant 0 : index
    %c0_6 = arith.constant 0 : index
    %c0_7 = arith.constant 0 : index
    %4 = vector.load %arg3[%c0_5, %c0_6, %c0_7] : memref<8x2x32xf32, #tpu.memory_space<vmem>>, vector<8x2x32xf32>
    tpu.vector_store %arg3[%c0_5, %c0_6, %c0_7], %3 {strides = array<i32>} : memref<8x2x32xf32, #tpu.memory_space<vmem>>, vector<8x2x32xf32>,
    return
  }
  func.func @transform_0(%arg0: i32) -> (i32, i32, i32) {
    %c0_i32 = arith.constant 0 : i32
    %c0_i32_0 = arith.constant 0 : i32
    %c0_i32_1 = arith.constant 0 : i32
    return %arg0, %c0_i32, %c0_i32_0 : i32, i32, i32
  }
  func.func @transform_1(%arg0: i32) -> (i32, i32, i32) {
    %c0_i32 = arith.constant 0 : i32
    %c0_i32_0 = arith.constant 0 : i32
    %c0_i32_1 = arith.constant 0 : i32
    return %arg0, %c0_i32, %c0_i32_0 : i32, i32, i32
  }
  func.func @transform_2(%arg0: i32) -> (i32, i32, i32) {
    %c0_i32 = arith.constant 0 : i32
    %c0_i32_0 = arith.constant 0 : i32
    %c0_i32_1 = arith.constant 0 : i32
    return %arg0, %c0_i32, %c0_i32_0 : i32, i32, i32
  }
}

</mosaic_0001>

<llo_original>
// kernel: tpu_custom_call.1
$region0: #{tpu_custom_call.1}
  #allocation0 [shape = 'u32[]', space=smem, size = 0x4, offset = 0x4, fixed_abs, tag = 'smem constant byte address 0x4 - core index']
  #allocation1 [shape = 'u32[144,128]{1,0:T(1,128)}', space=vmem, size = 0x12000, scoped, tag = 'internal scratch']
  %s0 = inlined_call_operand.hbm [shape: f32[8,2,32], index: 0, kind: input, shape index: {}]
  %s1 = inlined_call_operand.hbm [shape: f32[8,1,32], index: 1, kind: input, shape index: {}]
  %s2 = inlined_call_operand.hbm [shape: f32[8,2,32], index: 2, kind: output, shape index: {}]
  %s3 = sld [smem:[#allocation0]]
  $region26: #{tpu_custom_call.1} parent=0
    _
  %s5 = ssub.s32 1, %s3
  %s6 = scalar_select 0, %s5, %s3
  $region1: #{tpu_custom_call.1} parent=0
    #allocation2 [shape = 'u8[8192]{0}', space=vmem, size = 0x2000, scoped, tag = 'input window, operand 0, single buffered']
    #allocation3 [shape = 's32[1]{0}', space=sflag, size = 0x4, scoped, tag = 'scoped memory for tpu_custom_call.1']
    #allocation4 [shape = 's32[1]{0}', space=sflag, size = 0x4, scoped, tag = 'scoped memory for tpu_custom_call.1']
    #allocation5 [shape = 'u8[4096]{0}', space=vmem, size = 0x1000, scoped, tag = 'input window, operand 1, single buffered']
    #allocation6 [shape = 's32[1]{0}', space=sflag, size = 0x4, scoped, tag = 'scoped memory for tpu_custom_call.1']
    #allocation7 [shape = 'u8[8192]{0}', space=vmem, size = 0x2000, scoped, tag = 'output window, operand 0, single buffered']
    %7 = vsyncpa [#allocation3], 0
    %8 = vsyncpa [#allocation6], 0
    %9 = vsyncpa [#allocation4], 0
    // Predicated region
    $region2: #{tpu_custom_call.1} parent=1 // pred_check
      _
    $region3: #{tpu_custom_call.1} parent=1 // pred_check_branch
      %11 = sbr.rel (0) target = $region5
    $region4: #{tpu_custom_call.1} parent=1 // pred_region
      %s13 = ssub.s32 256, 256
      %14 = vsyncadd [#allocation3], %s13
      %s15 = sshll.u32 [#allocation2], 4
      %s16 = int_to_ptr.vmem [resolvable:$true] %s15
      %21 = dma.hbm_to_vmem [thread:$0]  %s0, 256, %s16, [#allocation3], 32, 32, 2
    $region5: #{tpu_custom_call.1} parent=1 // pred_fallthru
      _
    // Predicated region
    $region6: #{tpu_custom_call.1} parent=1 // pred_check
      _
    $region7: #{tpu_custom_call.1} parent=1 // pred_check_branch
      %23 = sbr.rel (0) target = $region9
    $region8: #{tpu_custom_call.1} parent=1 // pred_region
      %s25 = ssub.s32 128, 128
      %26 = vsyncadd [#allocation6], %s25
      %s27 = sshll.u32 [#allocation5], 4
      %s28 = int_to_ptr.vmem [resolvable:$true] %s27
      %33 = dma.hbm_to_vmem [thread:$0]  %s1, 128, %s28, [#allocation6], 16, 16, 1
    $region9: #{tpu_custom_call.1} parent=1 // pred_fallthru
      _
    // Predicated region
    $region10: #{tpu_custom_call.1} parent=1 // pred_check
      _
    $region11: #{tpu_custom_call.1} parent=1 // pred_check_branch
      %35 = sbr.rel (0) target = $region13
    $region12: #{tpu_custom_call.1} parent=1 // pred_region
      %36 = dma.done [#allocation3], 256
    $region13: #{tpu_custom_call.1} parent=1 // pred_fallthru
      _
    // Predicated region
    $region14: #{tpu_custom_call.1} parent=1 // pred_check
      _
    $region15: #{tpu_custom_call.1} parent=1 // pred_check_branch
      %38 = sbr.rel (0) target = $region17
    $region16: #{tpu_custom_call.1} parent=1 // pred_region
      %39 = dma.done [#allocation6], 128
    $region17: #{tpu_custom_call.1} parent=1 // pred_fallthru
      _
    %v40 = vld [vmem:[#allocation2] sm:$0x3]
    %v41 = vld [vmem:[#allocation2 + $0x2] sm:$0x3]
    %v42 = vld [vmem:[#allocation2 + $0x4] sm:$0x3]
    %v43 = vld [vmem:[#allocation2 + $0x6] sm:$0x3]
    %v44 = vld [vmem:[#allocation2 + $0x8] sm:$0x3]
    %v45 = vld [vmem:[#allocation2 + $0xa] sm:$0x3]
    %v46 = vld [vmem:[#allocation2 + $0xc] sm:$0x3]
    %v47 = vld [vmem:[#allocation2 + $0xe] sm:$0x3]
    %v48 = vld [vmem:[#allocation5] sm:$0x1]
    %v49 = vld [vmem:[#allocation5 + $0x1] sm:$0x1]
    %v50 = vld [vmem:[#allocation5 + $0x2] sm:$0x1]
    %v51 = vld [vmem:[#allocation5 + $0x3] sm:$0x1]
    %v52 = vld [vmem:[#allocation5 + $0x4] sm:$0x1]
    %v53 = vld [vmem:[#allocation5 + $0x5] sm:$0x1]
    %v54 = vld [vmem:[#allocation5 + $0x6] sm:$0x1]
    %v55 = vld [vmem:[#allocation5 + $0x7] sm:$0x1]
    %v64 = vlaneseq
    %v65 = vshrl.u32 %v64, 7
    %v66 = vsub.s32 0, %v65
    %v67 = vrot.slane %v48, %v66
    %v68 = vlaneseq
    %v69 = vshrl.u32 %v68, 7
    %v70 = vsub.s32 0, %v69
    %v71 = vrot.slane %v49, %v70
    %v72 = vlaneseq
    %v73 = vshrl.u32 %v72, 7
    %v74 = vsub.s32 0, %v73
    %v75 = vrot.slane %v50, %v74
    %v76 = vlaneseq
    %v77 = vshrl.u32 %v76, 7
    %v78 = vsub.s32 0, %v77
    %v79 = vrot.slane %v51, %v78
    %v80 = vlaneseq
    %v81 = vshrl.u32 %v80, 7
    %v82 = vsub.s32 0, %v81
    %v83 = vrot.slane %v52, %v82
    %v84 = vlaneseq
    %v85 = vshrl.u32 %v84, 7
    %v86 = vsub.s32 0, %v85
    %v87 = vrot.slane %v53, %v86
    %v88 = vlaneseq
    %v89 = vshrl.u32 %v88, 7
    %v90 = vsub.s32 0, %v89
    %v91 = vrot.slane %v54, %v90
    %v92 = vlaneseq
    %v93 = vshrl.u32 %v92, 7
    %v94 = vsub.s32 0, %v93
    %v95 = vrot.slane %v55, %v94
    %v104 = vadd.f32 %v40, %v67
    %v105 = vadd.f32 %v41, %v71
    %v106 = vadd.f32 %v42, %v75
    %v107 = vadd.f32 %v43, %v79
    %v108 = vadd.f32 %v44, %v83
    %v109 = vadd.f32 %v45, %v87
    %v110 = vadd.f32 %v46, %v91
    %v111 = vadd.f32 %v47, %v95
    %vm112 = vcmask 254976
    %113 = vst.msk [vmem:[#allocation7] sm:$0x3] %vm112, %v104
    %114 = vst.msk [vmem:[#allocation7 + $0x2] sm:$0x3] %vm112, %v105
    %115 = vst.msk [vmem:[#allocation7 + $0x4] sm:$0x3] %vm112, %v106
    %116 = vst.msk [vmem:[#allocation7 + $0x6] sm:$0x3] %vm112, %v107
    %117 = vst.msk [vmem:[#allocation7 + $0x8] sm:$0x3] %vm112, %v108
    %118 = vst.msk [vmem:[#allocation7 + $0xa] sm:$0x3] %vm112, %v109
    %119 = vst.msk [vmem:[#allocation7 + $0xc] sm:$0x3] %vm112, %v110
    %120 = vst.msk [vmem:[#allocation7 + $0xe] sm:$0x3] %vm112, %v111
    // Predicated region
    $region18: #{tpu_custom_call.1} parent=1 // pred_check
      _
    $region19: #{tpu_custom_call.1} parent=1 // pred_check_branch
      %122 = sbr.rel (0) target = $region21
    $region20: #{tpu_custom_call.1} parent=1 // pred_region
      %s124 = ssub.s32 256, 256
      %125 = vsyncadd [#allocation4], %s124
      %s126 = sshll.u32 [#allocation7], 4
      %s127 = int_to_ptr.vmem [resolvable:$true] %s126
      %132 = dma.vmem_to_hbm [thread:$0]  %s127, 256, %s2, [#allocation4], 32, 32, 2
    $region21: #{tpu_custom_call.1} parent=1 // pred_fallthru
      _
    // Predicated region
    $region22: #{tpu_custom_call.1} parent=1 // pred_check
      _
    $region23: #{tpu_custom_call.1} parent=1 // pred_check_branch
      %134 = sbr.rel (0) target = $region25
    $region24: #{tpu_custom_call.1} parent=1 // pred_region
      %135 = dma.done [#allocation4], 256
    $region25: #{tpu_custom_call.1} parent=1 // pred_fallthru
      _
    %136 = vsyncpa [#allocation3], 1
    %137 = vsyncpa [#allocation6], 1
    %138 = vsyncpa [#allocation4], 1

</llo_original>
